<compile_context>
chip_gen: v6e
topology: v6e:2x2x1
jax: 0.10.0
libtpu: 0.0.40
codegen_flags: <defaults>
</compile_context>

<pallas_src>
import jax
import jax.numpy as jnp
from jax.experimental import pallas as pl
from jax.experimental.pallas import tpu as pltpu  # noqa: F401  (kept for TPU-specific tuning hooks)


def _dup_block_kernel(x_ref, o_ref):
    # One full, aligned block store that writes both copies at once:
    # (B, C, L) -> broadcast over a new axis 1 -> (B, 2, C, L).
    x = x_ref[...]
    o_ref[...] = jnp.broadcast_to(x[:, None, :, :], o_ref.shape)


def cat_self_dim1(x):
    """Pallas equivalent of torch.cat((x, x), dim=1) for a 3-D tensor (B, C, L)."""
    b, c, l = x.shape
    out4 = pl.pallas_call(
        _dup_block_kernel,
        out_shape=jax.ShapeDtypeStruct((b, 2, c, l), x.dtype),
        # Single step: full-array blocks for both input and output.
        in_specs=[pl.BlockSpec((b, c, l), lambda: (0, 0, 0))],
        out_specs=pl.BlockSpec((b, 2, c, l), lambda: (0, 0, 0, 0)),
    )(x)
    # Contiguous reshape (B, 2, C, L) -> (B, 2*C, L) == concat along dim 1.
    return out4.reshape(b, 2 * c, l)


if __name__ == "__main__":
    key = jax.random.PRNGKey(0)
    x = jax.random.normal(key, (2, 3, 4), dtype=jnp.float32)

    y = jax.block_until_ready(cat_self_dim1(x))

    # Sanity check against plain JAX concatenation.
    ref = jnp.concatenate((x, x), axis=1)
    assert y.shape == (2, 6, 4)
    assert jnp.allclose(y, ref), "mismatch vs jnp.concatenate reference"

    print("KERNEL_OK")
</pallas_src>

<mosaic_0001>
module attributes {stable_mosaic.version = 11 : i64} {
  func.func @_dup_block_kernel(%arg0: memref<2x3x4xf32, #tpu.memory_space<vmem>>, %arg1: memref<2x2x3x4xf32, #tpu.memory_space<vmem>>) attributes {dimension_semantics = [], scalar_prefetch = 0 : i64, scratch_operands = 0 : i64, tpu.core_type = #tpu.core_type<tc>} {
    %c0 = arith.constant 0 : index
    %c0_0 = arith.constant 0 : index
    %c0_1 = arith.constant 0 : index
    %0 = vector.load %arg0[%c0, %c0_0, %c0_1] : memref<2x3x4xf32, #tpu.memory_space<vmem>>, vector<2x3x4xf32>
    %1 = vector.shape_cast %0 : vector<2x3x4xf32> to vector<2x1x3x4xf32>
    %2 = vector.shape_cast %1 : vector<2x1x3x4xf32> to vector<2x1x3x4xf32>
    %3 = vector.broadcast %2 : vector<2x1x3x4xf32> to vector<2x2x3x4xf32>
    %c0_2 = arith.constant 0 : index
    %c0_3 = arith.constant 0 : index
    %c0_4 = arith.constant 0 : index
    %c0_5 = arith.constant 0 : index
    %4 = vector.load %arg1[%c0_2, %c0_3, %c0_4, %c0_5] : memref<2x2x3x4xf32, #tpu.memory_space<vmem>>, vector<2x2x3x4xf32>
    tpu.vector_store %arg1[%c0_2, %c0_3, %c0_4, %c0_5], %3 {strides = array<i32>} : memref<2x2x3x4xf32, #tpu.memory_space<vmem>>, vector<2x2x3x4xf32>,
    return
  }
}

</mosaic_0001>

<llo_original>
// kernel: tpu_custom_call.1
$region0: #{tpu_custom_call.1}
  #allocation0 [shape = 'u32[]', space=smem, size = 0x4, offset = 0x4, fixed_abs, tag = 'smem constant byte address 0x4 - core index']
  #allocation1 [shape = 'u32[144,128]{1,0:T(1,128)}', space=vmem, size = 0x12000, scoped, tag = 'internal scratch']
  %s0 = inlined_call_operand.vmem [shape: f32[2,3,4], index: 0, kind: input, shape index: {}]
  %s1 = inlined_call_operand.vmem [shape: f32[2,2,3,4], index: 1, kind: output, shape index: {}]
  %s2 = sld [smem:[#allocation0]]
  $region14: #{tpu_custom_call.1} parent=0
    _
  %s4 = ssub.s32 1, %s2
  %s5 = scalar_select 0, %s4, %s2
  // Predicated region
  $region2: #{tpu_custom_call.1} parent=0 // pred_check
    _
  $region3: #{tpu_custom_call.1} parent=0 // pred_check_branch
    %7 = sbr.rel (0) target = $region5
  $region4: #{tpu_custom_call.1} parent=0 // pred_region
    _
  $region5: #{tpu_custom_call.1} parent=0 // pred_fallthru
    _
  %v8 = vld [vmem:[%s0] sm:$0x7]
  %v9 = vld [vmem:[%s0 + $0x4] sm:$0x7]
  %vm10 = vcmask 26624
  %11 = vst.msk [vmem:[%s1] sm:$0x7] %vm10, %v8
  %12 = vst.msk [vmem:[%s1 + $0x4] sm:$0x7] %vm10, %v8
  %13 = vst.msk [vmem:[%s1 + $0x8] sm:$0x7] %vm10, %v9
  %14 = vst.msk [vmem:[%s1 + $0xc] sm:$0x7] %vm10, %v9
  // Predicated region
  $region6: #{tpu_custom_call.1} parent=0 // pred_check
    _
  $region7: #{tpu_custom_call.1} parent=0 // pred_check_branch
    %16 = sbr.rel (0) target = $region9
  $region8: #{tpu_custom_call.1} parent=0 // pred_region
    _
  $region9: #{tpu_custom_call.1} parent=0 // pred_fallthru
    _
  // Predicated region
  $region10: #{tpu_custom_call.1} parent=0 // pred_check
    _
  $region11: #{tpu_custom_call.1} parent=0 // pred_check_branch
    %18 = sbr.rel (0) target = $region13
  $region12: #{tpu_custom_call.1} parent=0 // pred_region
    _
  $region13: #{tpu_custom_call.1} parent=0 // pred_fallthru
    _

</llo_original>
